<compile_context>
chip_gen: v6e
topology: v6e:2x2x1
jax: 0.10.0
libtpu: 0.0.40
codegen_flags: <defaults>
</compile_context>

<pallas_src>
import functools

import jax
import jax.numpy as jnp
from jax.experimental import pallas as pl
from jax.experimental.pallas import tpu as pltpu


def _round_up(n, m):
    return ((n + m - 1) // m) * m


def _pad2(x, rows, cols, dtype=jnp.float32):
    x = x.astype(dtype)
    return jnp.pad(x, ((0, rows - x.shape[0]), (0, cols - x.shape[1])))


def _mxu_is_256_wide():
    """True on v6e/v7x (256x256 MXU) -> pack both critics into 256-wide matmuls."""
    try:
        kind = jax.devices()[0].device_kind.lower()
    except Exception:
        return True
    return any(tag in kind for tag in ("v6", "v7", "7x"))


# --------------------------------------------------------------------------
# Kernels
# --------------------------------------------------------------------------
def _critic_kernel_packed(x_ref, w1_ref, b1_ref, w2_ref, b2_ref, w3_ref, b3_ref,
                          out_ref, *, hp):
    """Both critics packed into 256-wide matmuls (W2 is block-diagonal)."""
    x = x_ref[...]                                                  # (TB, KP)
    h1 = jnp.dot(x, w1_ref[...], preferred_element_type=jnp.float32) + b1_ref[...]
    h1 = jnp.maximum(h1, 0.0)                                       # (TB, 2*HP) f32
    h2 = (jnp.dot(h1.astype(w2_ref.dtype), w2_ref[...],
                  preferred_element_type=jnp.float32) + b2_ref[...])
    h2 = jnp.maximum(h2, 0.0)                                       # (TB, 2*HP) f32
    # layer 3 (hidden -> 1): VPU multiply + lane reduction (XLU), per critic half
    prod = h2 * w3_ref[...]                                         # (TB, 2*HP)
    q1 = jnp.sum(prod[:, :hp], axis=-1, keepdims=True) + b3_ref[0]  # (TB, 1)
    q2 = jnp.sum(prod[:, hp:], axis=-1, keepdims=True) + b3_ref[1]  # (TB, 1)
    out_ref[:, 0:1] = q1.astype(out_ref.dtype)
    out_ref[:, 1:2] = q2.astype(out_ref.dtype)


def _critic_kernel_split(x_ref, w1_ref, b1_ref, w2_ref, b2_ref, w3_ref, b3_ref,
                         out_ref):
    """Per-critic 128-wide matmuls (v5e-style MXU); statically unrolled."""
    x = x_ref[...]                                                  # (TB, KP)
    for c in range(2):
        h1 = jnp.dot(x, w1_ref[c], preferred_element_type=jnp.float32) + b1_ref[c]
        h1 = jnp.maximum(h1, 0.0)                                   # f32 elementwise
        h2 = (jnp.dot(h1.astype(w2_ref.dtype), w2_ref[c],
                      preferred_element_type=jnp.float32) + b2_ref[c])
        h2 = jnp.maximum(h2, 0.0)
        q = jnp.sum(h2 * w3_ref[c], axis=-1, keepdims=True) + b3_ref[c]
        out_ref[:, c:c + 1] = q.astype(out_ref.dtype)


# --------------------------------------------------------------------------
# Wrapper
# --------------------------------------------------------------------------
def pack_critic_params(params_q1, params_q2, *, matmul_dtype=jnp.bfloat16,
                       pack_critics=None):
    """Pad / stack / cast both critics' weights ONCE (hoist out of the step path)."""
    if pack_critics is None:
        pack_critics = _mxu_is_256_wide()
    w1a, b1a, w2a, b2a, w3a, b3a = params_q1
    w1b, b1b, w2b, b2b, w3b, b3b = params_q2
    in_dim, hidden = w1a.shape
    KP = _round_up(in_dim, 128)
    HP = _round_up(hidden, 128)
    b3 = jnp.stack([b3a.reshape(()), b3b.reshape(())]).astype(jnp.float32)

    if pack_critics:
        # layer 1: stack along N -> one (KP, 2*HP) matmul
        w1 = jnp.concatenate([_pad2(w1a, KP, HP, matmul_dtype),
                              _pad2(w1b, KP, HP, matmul_dtype)], axis=1)
        b1 = jnp.concatenate([_pad2(b1a.reshape(1, -1), 1, HP),
                              _pad2(b1b.reshape(1, -1), 1, HP)], axis=1)
        # layer 2: block-diagonal -> one (2*HP, 2*HP) matmul on the fused hidden
        w2 = jnp.zeros((2 * HP, 2 * HP), matmul_dtype)
        w2 = w2.at[:HP, :HP].set(_pad2(w2a, HP, HP, matmul_dtype))
        w2 = w2.at[HP:, HP:].set(_pad2(w2b, HP, HP, matmul_dtype))
        b2 = jnp.concatenate([_pad2(b2a.reshape(1, -1), 1, HP),
                              _pad2(b2b.reshape(1, -1), 1, HP)], axis=1)
        w3 = jnp.concatenate([_pad2(w3a.reshape(1, -1), 1, HP),
                              _pad2(w3b.reshape(1, -1), 1, HP)], axis=1)
    else:
        w1 = jnp.stack([_pad2(w1a, KP, HP, matmul_dtype),
                        _pad2(w1b, KP, HP, matmul_dtype)])
        b1 = jnp.stack([_pad2(b1a.reshape(1, -1), 1, HP),
                        _pad2(b1b.reshape(1, -1), 1, HP)])
        w2 = jnp.stack([_pad2(w2a, HP, HP, matmul_dtype),
                        _pad2(w2b, HP, HP, matmul_dtype)])
        b2 = jnp.stack([_pad2(b2a.reshape(1, -1), 1, HP),
                        _pad2(b2b.reshape(1, -1), 1, HP)])
        w3 = jnp.stack([_pad2(w3a.reshape(1, -1), 1, HP),
                        _pad2(w3b.reshape(1, -1), 1, HP)])
    return dict(packed=bool(pack_critics), in_dim=in_dim, kp=KP, hp=HP,
                matmul_dtype=matmul_dtype, weights=(w1, b1, w2, b2, w3, b3))


def critic_forward_packed(obs, action, packed, *, batch_tile=512):
    """Runs both SAC critics (Q1, Q2) in one Pallas call. Returns (q1, q2)."""
    B = obs.shape[0]
    assert action.shape[0] == B
    x = jnp.concatenate([obs, action], axis=1)      # one 128-lane K block
    assert x.shape[1] == packed["in_dim"]
    KP, HP = packed["kp"], packed["hp"]

    # Batch tiling: single step for small B; >=2 steps for large B so the
    # "parallel" batch axis can shard across both TensorCores on v7x.
    TB = _round_up(B, 8) if B <= batch_tile else _round_up(batch_tile, 8)
    B_pad = _round_up(B, TB)
    nb = B_pad // TB

    x_p = _pad2(x, B_pad, KP, packed["matmul_dtype"])
    w1, b1, w2, b2, w3, b3 = packed["weights"]

    if packed["packed"]:
        HP2 = 2 * HP
        const = lambda i: (0, 0)
        kernel = functools.partial(_critic_kernel_packed, hp=HP)
        in_specs = [
            pl.BlockSpec((TB, KP), lambda i: (i, 0)),           # fused obs+action tile
            pl.BlockSpec((KP, HP2), const),                     # W1 (both critics, resident)
            pl.BlockSpec((1, HP2), const),                      # b1
            pl.BlockSpec((HP2, HP2), const),                    # W2 block-diagonal
            pl.BlockSpec((1, HP2), const),                      # b2
            pl.BlockSpec((1, HP2), const),                      # W3 rows
            pl.BlockSpec(memory_space=pltpu.MemorySpace.SMEM),  # b3 scalars
        ]
    else:
        const3 = lambda i: (0, 0, 0)
        kernel = _critic_kernel_split
        in_specs = [
            pl.BlockSpec((TB, KP), lambda i: (i, 0)),           # fused obs+action tile
            pl.BlockSpec((2, KP, HP), const3),                  # W1 (stacked, resident)
            pl.BlockSpec((2, 1, HP), const3),                   # b1
            pl.BlockSpec((2, HP, HP), const3),                  # W2
            pl.BlockSpec((2, 1, HP), const3),                   # b2
            pl.BlockSpec((2, 1, HP), const3),                   # W3 rows
            pl.BlockSpec(memory_space=pltpu.MemorySpace.SMEM),  # b3 scalars
        ]

    out = pl.pallas_call(
        kernel,
        out_shape=jax.ShapeDtypeStruct((B_pad, 2), jnp.float32),
        grid=(nb,),
        in_specs=in_specs,
        out_specs=pl.BlockSpec((TB, 2), lambda i: (i, 0)),      # batch on sublanes
        compiler_params=pltpu.CompilerParams(
            dimension_semantics=("parallel",)),
    )(x_p, w1, b1, w2, b2, w3, b3)

    return out[:B, 0:1], out[:B, 1:2]


def critic_forward(obs, action, params_q1, params_q2, *, batch_tile=512,
                   matmul_dtype=jnp.bfloat16, pack_critics=None):
    """Convenience wrapper (packs every call; prefer pre-packing in a loop)."""
    packed = pack_critic_params(params_q1, params_q2, matmul_dtype=matmul_dtype,
                                pack_critics=pack_critics)
    return critic_forward_packed(obs, action, packed, batch_tile=batch_tile)


# --------------------------------------------------------------------------
# Init + reference + self-test
# --------------------------------------------------------------------------
def init_qfunction_params(key, obs_dim, action_dim, hidden_dim):
    """torch.nn.Linear-style uniform init; weights stored as (in, out)."""
    in_dim = obs_dim + action_dim
    ks = jax.random.split(key, 6)

    def uinit(k, shape, fan_in):
        bound = 1.0 / (fan_in ** 0.5)
        return jax.random.uniform(k, shape, jnp.float32, -bound, bound)

    w1 = uinit(ks[0], (in_dim, hidden_dim), in_dim)
    b1 = uinit(ks[1], (hidden_dim,), in_dim)
    w2 = uinit(ks[2], (hidden_dim, hidden_dim), hidden_dim)
    b2 = uinit(ks[3], (hidden_dim,), hidden_dim)
    w3 = uinit(ks[4], (hidden_dim, 1), hidden_dim)
    b3 = uinit(ks[5], (1,), hidden_dim)
    return (w1, b1, w2, b2, w3, b3)


def critic_ref(obs, action, params_q1, params_q2):
    """Pure-JAX reference (matches the PyTorch Critic Q heads)."""
    hp = jax.lax.Precision.HIGHEST

    def qf(params):
        w1, b1, w2, b2, w3, b3 = params
        x = jnp.concatenate([obs, action], axis=1)
        h1 = jnp.maximum(jnp.dot(x, w1, precision=hp) + b1, 0.0)
        h2 = jnp.maximum(jnp.dot(h1, w2, precision=hp) + b2, 0.0)
        return jnp.dot(h2, w3, precision=hp) + b3

    return qf(params_q1), qf(params_q2)


if __name__ == "__main__":
    B, OBS_FEAT, ACT_DIM, HIDDEN = 8, 16, 4, 32

    key = jax.random.PRNGKey(0)
    k_obs, k_act, k_q1, k_q2 = jax.random.split(key, 4)

    # TODO(synk): Critic.encoder (make_encoder conv stack) is not defined in the
    # provided spec; `obs` here stands in for the encoder's feature output.
    obs = jax.random.normal(k_obs, (B, OBS_FEAT), jnp.float32)
    action = jax.random.normal(k_act, (B, ACT_DIM), jnp.float32)
    params_q1 = init_qfunction_params(k_q1, OBS_FEAT, ACT_DIM, HIDDEN)
    params_q2 = init_qfunction_params(k_q2, OBS_FEAT, ACT_DIM, HIDDEN)

    r1, r2 = critic_ref(obs, action, params_q1, params_q2)

    # (pack_critics, matmul_dtype, tolerance) -- exercise both MXU paths.
    configs = [
        (True,  jnp.bfloat16, 5e-2),   # v6e/v7x-style 256-wide critic packing
        (False, jnp.bfloat16, 5e-2),   # v5e-style per-critic 128-wide matmuls
        (None,  jnp.float32,  1e-3),   # auto-detected path, f32 operands
    ]
    for pack, dt, tol in configs:
        packed = pack_critic_params(params_q1, params_q2,
                                    matmul_dtype=dt, pack_critics=pack)
        q1, q2 = critic_forward_packed(obs, action, packed)
        q1 = jax.block_until_ready(q1)
        q2 = jax.block_until_ready(q2)
        assert q1.shape == (B, 1) and q2.shape == (B, 1), (q1.shape, q2.shape)
        assert jnp.allclose(q1, r1, atol=tol, rtol=tol), (pack, dt, q1, r1)
        assert jnp.allclose(q2, r2, atol=tol, rtol=tol), (pack, dt, q2, r2)

    # Multi-tile batch grid (B > batch_tile) to exercise the grid index maps.
    B2 = 24
    obs2 = jax.random.normal(k_obs, (B2, OBS_FEAT), jnp.float32)
    act2 = jax.random.normal(k_act, (B2, ACT_DIM), jnp.float32)
    packed = pack_critic_params(params_q1, params_q2)
    q1b, q2b = critic_forward_packed(obs2, act2, packed, batch_tile=8)
    q1b = jax.block_until_ready(q1b)
    q2b = jax.block_until_ready(q2b)
    r1b, r2b = critic_ref(obs2, act2, params_q1, params_q2)
    assert q1b.shape == (B2, 1) and q2b.shape == (B2, 1)
    assert jnp.allclose(q1b, r1b, atol=5e-2, rtol=5e-2)
    assert jnp.allclose(q2b, r2b, atol=5e-2, rtol=5e-2)

    print("KERNEL_OK")
</pallas_src>

<mosaic_0001>
module attributes {stable_mosaic.version = 11 : i64} {
  func.func @_critic_kernel_packed(%arg0: i32, %arg1: memref<8x128xbf16, #tpu.memory_space<vmem>>, %arg2: memref<128x256xbf16, #tpu.memory_space<vmem>>, %arg3: memref<1x256xf32, #tpu.memory_space<vmem>>, %arg4: memref<256x256xbf16, #tpu.memory_space<vmem>>, %arg5: memref<1x256xf32, #tpu.memory_space<vmem>>, %arg6: memref<1x256xf32, #tpu.memory_space<vmem>>, %arg7: memref<2xf32, #tpu.memory_space<smem>>, %arg8: memref<8x2xf32, #tpu.memory_space<vmem>>) attributes {dimension_semantics = [#tpu.dimension_semantics<parallel>], iteration_bounds = array<i64: 1>, scalar_prefetch = 0 : i64, scratch_operands = 0 : i64, tpu.core_type = #tpu.core_type<tc>, window_params = [{transform_indices = @transform_0, window_bounds = array<i64: 8, 128>}, {pipeline_mode = #tpu.pipeline_mode<synchronous>, transform_indices = @transform_1, window_bounds = array<i64: 128, 256>}, {pipeline_mode = #tpu.pipeline_mode<synchronous>, transform_indices = @transform_2, window_bounds = array<i64: 1, 256>}, {pipeline_mode = #tpu.pipeline_mode<synchronous>, transform_indices = @transform_3, window_bounds = array<i64: 256, 256>}, {pipeline_mode = #tpu.pipeline_mode<synchronous>, transform_indices = @transform_4, window_bounds = array<i64: 1, 256>}, {pipeline_mode = #tpu.pipeline_mode<synchronous>, transform_indices = @transform_5, window_bounds = array<i64: 1, 256>}, {transform_indices = @transform_6, window_bounds = array<i64: 2>}, {transform_indices = @transform_7, window_bounds = array<i64: 8, 2>}]} {
    %c0 = arith.constant 0 : index
    %c0_0 = arith.constant 0 : index
    %0 = vector.load %arg1[%c0, %c0_0] : memref<8x128xbf16, #tpu.memory_space<vmem>>, vector<8x128xbf16>
    %c0_1 = arith.constant 0 : index
    %c0_2 = arith.constant 0 : index
    %1 = vector.load %arg2[%c0_1, %c0_2] : memref<128x256xbf16, #tpu.memory_space<vmem>>, vector<128x256xbf16>
    %cst = arith.constant dense<0.000000e+00> : vector<8x256xf32>
    %2 = tpu.matmul %0, %1, %cst {dimension_numbers = #tpu.dot_dimension_numbers<[1], [0], [0], [1], [0, 0, 1, 1], [], []>} : vector<8x128xbf16>, vector<128x256xbf16>, vector<8x256xf32> -> vector<8x256xf32>
    %c0_3 = arith.constant 0 : index
    %c0_4 = arith.constant 0 : index
    %3 = vector.load %arg3[%c0_3, %c0_4] : memref<1x256xf32, #tpu.memory_space<vmem>>, vector<1x256xf32>
    %4 = vector.broadcast %3 : vector<1x256xf32> to vector<8x256xf32>
    %5 = arith.addf %2, %4 : vector<8x256xf32>
    %cst_5 = arith.constant 0.000000e+00 : f32
    %6 = vector.broadcast %cst_5 : f32 to vector<8x256xf32>
    %7 = arith.maximumf %5, %6 : vector<8x256xf32>
    %8 = arith.truncf %7 : vector<8x256xf32> to vector<8x256xbf16>
    %c0_6 = arith.constant 0 : index
    %c0_7 = arith.constant 0 : index
    %9 = vector.load %arg4[%c0_6, %c0_7] : memref<256x256xbf16, #tpu.memory_space<vmem>>, vector<256x256xbf16>
    %cst_8 = arith.constant dense<0.000000e+00> : vector<8x256xf32>
    %10 = tpu.matmul %8, %9, %cst_8 {dimension_numbers = #tpu.dot_dimension_numbers<[1], [0], [0], [1], [0, 0, 1, 1], [], []>} : vector<8x256xbf16>, vector<256x256xbf16>, vector<8x256xf32> -> vector<8x256xf32>
    %c0_9 = arith.constant 0 : index
    %c0_10 = arith.constant 0 : index
    %11 = vector.load %arg5[%c0_9, %c0_10] : memref<1x256xf32, #tpu.memory_space<vmem>>, vector<1x256xf32>
    %12 = vector.broadcast %11 : vector<1x256xf32> to vector<8x256xf32>
    %13 = arith.addf %10, %12 : vector<8x256xf32>
    %cst_11 = arith.constant 0.000000e+00 : f32
    %14 = vector.broadcast %cst_11 : f32 to vector<8x256xf32>
    %15 = arith.maximumf %13, %14 : vector<8x256xf32>
    %c0_12 = arith.constant 0 : index
    %c0_13 = arith.constant 0 : index
    %16 = vector.load %arg6[%c0_12, %c0_13] : memref<1x256xf32, #tpu.memory_space<vmem>>, vector<1x256xf32>
    %17 = vector.broadcast %16 : vector<1x256xf32> to vector<8x256xf32>
    %18 = arith.mulf %15, %17 : vector<8x256xf32>
    %19 = vector.extract_strided_slice %18 {offsets = [0, 0], sizes = [8, 128], strides = [1, 1]} : vector<8x256xf32> to vector<8x128xf32>
    %cst_14 = arith.constant dense<0.000000e+00> : vector<8xf32>
    %20 = vector.multi_reduction <add>, %19, %cst_14 [1] : vector<8x128xf32> to vector<8xf32>
    %21 = vector.shape_cast %20 : vector<8xf32> to vector<8x1xf32>
    %c0_15 = arith.constant 0 : index
    %22 = memref.load %arg7[%c0_15] : memref<2xf32, #tpu.memory_space<smem>>
    %23 = vector.broadcast %22 : f32 to vector<8x1xf32>
    %24 = arith.addf %21, %23 : vector<8x1xf32>
    %25 = vector.extract_strided_slice %18 {offsets = [0, 128], sizes = [8, 128], strides = [1, 1]} : vector<8x256xf32> to vector<8x128xf32>
    %cst_16 = arith.constant dense<0.000000e+00> : vector<8xf32>
    %26 = vector.multi_reduction <add>, %25, %cst_16 [1] : vector<8x128xf32> to vector<8xf32>
    %27 = vector.shape_cast %26 : vector<8xf32> to vector<8x1xf32>
    %c1 = arith.constant 1 : index
    %28 = memref.load %arg7[%c1] : memref<2xf32, #tpu.memory_space<smem>>
    %29 = vector.broadcast %28 : f32 to vector<8x1xf32>
    %30 = arith.addf %27, %29 : vector<8x1xf32>
    %c0_17 = arith.constant 0 : index
    %c0_18 = arith.constant 0 : index
    %31 = vector.load %arg8[%c0_17, %c0_18] : memref<8x2xf32, #tpu.memory_space<vmem>>, vector<8x1xf32>
    tpu.vector_store %arg8[%c0_17, %c0_18], %24 {strides = array<i32>} : memref<8x2xf32, #tpu.memory_space<vmem>>, vector<8x1xf32>,
    %c0_19 = arith.constant 0 : index
    %c1_20 = arith.constant 1 : index
    %32 = vector.load %arg8[%c0_19, %c1_20] : memref<8x2xf32, #tpu.memory_space<vmem>>, vector<8x1xf32>
    tpu.vector_store %arg8[%c0_19, %c1_20], %30 {strides = array<i32>} : memref<8x2xf32, #tpu.memory_space<vmem>>, vector<8x1xf32>,
    return
  }
  func.func @transform_0(%arg0: i32) -> (i32, i32) {
    %c0_i32 = arith.constant 0 : i32
    %c0_i32_0 = arith.constant 0 : i32
    return %arg0, %c0_i32 : i32, i32
  }
  func.func @transform_1(%arg0: i32) -> (i32, i32) {
    %c0_i32 = arith.constant 0 : i32
    %c0_i32_0 = arith.constant 0 : i32
    %c0_i32_1 = arith.constant 0 : i32
    return %c0_i32, %c0_i32_0 : i32, i32
  }
  func.func @transform_2(%arg0: i32) -> (i32, i32) {
    %c0_i32 = arith.constant 0 : i32
    %c0_i32_0 = arith.constant 0 : i32
    %c0_i32_1 = arith.constant 0 : i32
    return %c0_i32, %c0_i32_0 : i32, i32
  }
  func.func @transform_3(%arg0: i32) -> (i32, i32) {
    %c0_i32 = arith.constant 0 : i32
    %c0_i32_0 = arith.constant 0 : i32
    %c0_i32_1 = arith.constant 0 : i32
    return %c0_i32, %c0_i32_0 : i32, i32
  }
  func.func @transform_4(%arg0: i32) -> (i32, i32) {
    %c0_i32 = arith.constant 0 : i32
    %c0_i32_0 = arith.constant 0 : i32
    %c0_i32_1 = arith.constant 0 : i32
    return %c0_i32, %c0_i32_0 : i32, i32
  }
  func.func @transform_5(%arg0: i32) -> (i32, i32) {
    %c0_i32 = arith.constant 0 : i32
    %c0_i32_0 = arith.constant 0 : i32
    %c0_i32_1 = arith.constant 0 : i32
    return %c0_i32, %c0_i32_0 : i32, i32
  }
  func.func @transform_6(%arg0: i32) -> i32 {
    %c0_i32 = arith.constant 0 : i32
    %c0_i32_0 = arith.constant 0 : i32
    return %c0_i32 : i32
  }
  func.func @transform_7(%arg0: i32) -> (i32, i32) {
    %c0_i32 = arith.constant 0 : i32
    %c0_i32_0 = arith.constant 0 : i32
    return %arg0, %c0_i32 : i32, i32
  }
}

</mosaic_0001>

<llo_original>
// kernel: tpu_custom_call.1
$region0: #{tpu_custom_call.1}
  #allocation0 [shape = 'u32[]', space=smem, size = 0x4, offset = 0x4, fixed_abs, tag = 'smem constant byte address 0x4 - core index']
  #allocation1 [shape = 'u32[144,128]{1,0:T(1,128)}', space=vmem, size = 0x12000, scoped, tag = 'internal scratch']
  %s0 = inlined_call_operand.hbm [shape: bf16[8,128], index: 0, kind: input, shape index: {}]
  %s1 = inlined_call_operand.hbm [shape: bf16[128,256], index: 1, kind: input, shape index: {}]
  %s2 = inlined_call_operand.vmem [shape: f32[1,256], index: 2, kind: input, shape index: {}]
  %s3 = inlined_call_operand.hbm [shape: bf16[256,256], index: 3, kind: input, shape index: {}]
  %s4 = inlined_call_operand.vmem [shape: f32[1,256], index: 4, kind: input, shape index: {}]
  %s5 = inlined_call_operand.vmem [shape: f32[1,256], index: 5, kind: input, shape index: {}]
  %s6 = inlined_call_operand.vmem [shape: f32[2], index: 6, kind: input, shape index: {}]
  %s7 = inlined_call_operand.vmem [shape: f32[8,2], index: 7, kind: output, shape index: {}]
  %s8 = sld [smem:[#allocation0]]
  $region54: #{tpu_custom_call.1} parent=0
    _
  %s10 = ssub.s32 1, %s8
  %s11 = scalar_select 0, %s10, %s8
  $region1: #{tpu_custom_call.1} parent=0
    #allocation2 [shape = 'u8[2048]{0}', space=vmem, size = 0x800, scoped, tag = 'input window, operand 0, single buffered']
    #allocation3 [shape = 's32[1]{0}', space=sflag, size = 0x4, scoped, tag = 'scoped memory for tpu_custom_call.1']
    #allocation4 [shape = 's32[1]{0}', space=sflag, size = 0x4, scoped, tag = 'scoped memory for tpu_custom_call.1']
    #allocation5 [shape = 'u8[65536]{0}', space=vmem, size = 0x10000, scoped, tag = 'input window, operand 1, single buffered']
    #allocation6 [shape = 's32[1]{0}', space=sflag, size = 0x4, scoped, tag = 'scoped memory for tpu_custom_call.1']
    #allocation7 [shape = 'u8[131072]{0}', space=vmem, size = 0x20000, scoped, tag = 'input window, operand 3, single buffered']
    #allocation8 [shape = 'u8[512]{0}', space=smem, size = 0x200, scoped, tag = 'input window, operand 6, single buffered']
    %12 = vsyncpa [#allocation3], 0
    %13 = vsyncpa [#allocation6], 0
    %14 = vsyncpa [#allocation4], 0
    // Predicated region
    $region2: #{tpu_custom_call.1} parent=1 // pred_check
      _
    $region3: #{tpu_custom_call.1} parent=1 // pred_check_branch
      %16 = sbr.rel (0) target = $region5
    $region4: #{tpu_custom_call.1} parent=1 // pred_region
      %s18 = ssub.s32 64, 64
      %19 = vsyncadd [#allocation3], %s18
      %s21 = sshll.u32 [#allocation2], 4
      %s22 = int_to_ptr.vmem [resolvable:$true] %s21
      %24 = dma.hbm_to_vmem [thread:$0]  %s0, 64, %s22, [#allocation3]
    $region5: #{tpu_custom_call.1} parent=1 // pred_fallthru
      _
    // Predicated region
    $region6: #{tpu_custom_call.1} parent=1 // pred_check
      _
    $region7: #{tpu_custom_call.1} parent=1 // pred_check_branch
      %26 = sbr.rel (0) target = $region9
    $region8: #{tpu_custom_call.1} parent=1 // pred_region
      %s28 = ssub.s32 2048, 2048
      %29 = vsyncadd [#allocation6], %s28
      %s30 = sshll.u32 [#allocation5], 4
      %s31 = int_to_ptr.vmem [resolvable:$true] %s30
      %36 = dma.hbm_to_vmem [thread:$0]  %s1, 2048, %s31, [#allocation6], 128, 128, 8
    $region9: #{tpu_custom_call.1} parent=1 // pred_fallthru
      _
    // Predicated region
    $region10: #{tpu_custom_call.1} parent=1 // pred_check
      _
    $region11: #{tpu_custom_call.1} parent=1 // pred_check_branch
      %38 = sbr.rel (0) target = $region13
    $region12: #{tpu_custom_call.1} parent=1 // pred_region
      _
    $region13: #{tpu_custom_call.1} parent=1 // pred_fallthru
      _
    // Predicated region
    $region14: #{tpu_custom_call.1} parent=1 // pred_check
      _
    $region15: #{tpu_custom_call.1} parent=1 // pred_check_branch
      %40 = sbr.rel (0) target = $region17
    $region16: #{tpu_custom_call.1} parent=1 // pred_region
      %s42 = ssub.s32 4096, 4096
      %43 = vsyncadd [#allocation6], %s42
      %s44 = sshll.u32 [#allocation7], 4
      %s45 = int_to_ptr.vmem [resolvable:$true] %s44
      %50 = dma.hbm_to_vmem [thread:$0]  %s3, 4096, %s45, [#allocation6], 128, 128, 8
    $region17: #{tpu_custom_call.1} parent=1 // pred_fallthru
      _
    // Predicated region
    $region18: #{tpu_custom_call.1} parent=1 // pred_check
      _
    $region19: #{tpu_custom_call.1} parent=1 // pred_check_branch
      %52 = sbr.rel (0) target = $region21
    $region20: #{tpu_custom_call.1} parent=1 // pred_region
      _
    $region21: #{tpu_custom_call.1} parent=1 // pred_fallthru
      _
    // Predicated region
    $region22: #{tpu_custom_call.1} parent=1 // pred_check
      _
    $region23: #{tpu_custom_call.1} parent=1 // pred_check_branch
      %54 = sbr.rel (0) target = $region25
    $region24: #{tpu_custom_call.1} parent=1 // pred_region
      _
    $region25: #{tpu_custom_call.1} parent=1 // pred_fallthru
      _
    // Predicated region
    $region26: #{tpu_custom_call.1} parent=1 // pred_check
      _
    $region27: #{tpu_custom_call.1} parent=1 // pred_check_branch
      %56 = sbr.rel (0) target = $region29
    $region28: #{tpu_custom_call.1} parent=1 // pred_region
      %s58 = ssub.s32 16, 16
      %59 = vsyncadd [#allocation4], %s58
      %s61 = sshll.u32 %s6, 4
      %s62 = int_to_ptr.vmem [resolvable:$true] %s61
      %64 = dma.vmem_to_smem %s62, 16, [#allocation8], [#allocation4]
    $region29: #{tpu_custom_call.1} parent=1 // pred_fallthru
      _
    // Predicated region
    $region30: #{tpu_custom_call.1} parent=1 // pred_check
      _
    $region31: #{tpu_custom_call.1} parent=1 // pred_check_branch
      %66 = sbr.rel (0) target = $region33
    $region32: #{tpu_custom_call.1} parent=1 // pred_region
      %67 = dma.done [#allocation3], 64
    $region33: #{tpu_custom_call.1} parent=1 // pred_fallthru
      _
    // Predicated region
    $region34: #{tpu_custom_call.1} parent=1 // pred_check
      _
    $region35: #{tpu_custom_call.1} parent=1 // pred_check_branch
      %69 = sbr.rel (0) target = $region37
    $region36: #{tpu_custom_call.1} parent=1 // pred_region
      %70 = dma.done [#allocation6], 2048
    $region37: #{tpu_custom_call.1} parent=1 // pred_fallthru
      _
    // Predicated region
    $region38: #{tpu_custom_call.1} parent=1 // pred_check
      _
    $region39: #{tpu_custom_call.1} parent=1 // pred_check_branch
      %72 = sbr.rel (0) target = $region41
    $region40: #{tpu_custom_call.1} parent=1 // pred_region
      %73 = dma.done [#allocation6], 4096
    $region41: #{tpu_custom_call.1} parent=1 // pred_fallthru
      _
    // Predicated region
    $region42: #{tpu_custom_call.1} parent=1 // pred_check
      _
    $region43: #{tpu_custom_call.1} parent=1 // pred_check_branch
      %75 = sbr.rel (0) target = $region45
    $region44: #{tpu_custom_call.1} parent=1 // pred_region
      %76 = dma.done [#allocation4], 16
    $region45: #{tpu_custom_call.1} parent=1 // pred_fallthru
      _
    %77 = sfence
    %v79 = vld [vmem:[#allocation2] sm:$0xf]
    %v80 = vld [vmem:[#allocation5] sm:$0xff]
    %v81 = vld [vmem:[#allocation5 + $0x8] sm:$0xff]
    %v82 = vld [vmem:[#allocation5 + $0x10] sm:$0xff]
    %v83 = vld [vmem:[#allocation5 + $0x18] sm:$0xff]
    %v84 = vld [vmem:[#allocation5 + $0x20] sm:$0xff]
    %v85 = vld [vmem:[#allocation5 + $0x28] sm:$0xff]
    %v86 = vld [vmem:[#allocation5 + $0x30] sm:$0xff]
    %v87 = vld [vmem:[#allocation5 + $0x38] sm:$0xff]
    %v88 = vld [vmem:[#allocation5 + $0x40] sm:$0xff]
    %v89 = vld [vmem:[#allocation5 + $0x48] sm:$0xff]
    %v90 = vld [vmem:[#allocation5 + $0x50] sm:$0xff]
    %v91 = vld [vmem:[#allocation5 + $0x58] sm:$0xff]
    %v92 = vld [vmem:[#allocation5 + $0x60] sm:$0xff]
    %v93 = vld [vmem:[#allocation5 + $0x68] sm:$0xff]
    %v94 = vld [vmem:[#allocation5 + $0x70] sm:$0xff]
    %v95 = vld [vmem:[#allocation5 + $0x78] sm:$0xff]
    %v96 = vld [vmem:[%s2] sm:$0x3]
    %v98 = vlaneseq
    %v99 = vshrl.u32 %v98, 7
    %v100 = vsub.s32 0, %v99
    %v101 = vrot.slane %v96, %v100
    %v102 = vlaneseq
    %v103 = vshrl.u32 %v102, 7
    %v104 = vsub.s32 1, %v103
    %v105 = vrot.slane %v96, %v104
    %v124 = vunpack.c.l.b16 %v80
    %v125 = vunpack.c.h.b16 %v80
    %v126 = vunpack.c.l.b16 %v81
    %v127 = vunpack.c.h.b16 %v81
    %v128 = vunpack.c.l.b16 %v82
    %v129 = vunpack.c.h.b16 %v82
    %v130 = vunpack.c.l.b16 %v83
    %v131 = vunpack.c.h.b16 %v83
    %v132 = vunpack.c.l.b16 %v84
    %v133 = vunpack.c.h.b16 %v84
    %v134 = vunpack.c.l.b16 %v85
    %v135 = vunpack.c.h.b16 %v85
    %v136 = vunpack.c.l.b16 %v86
    %v137 = vunpack.c.h.b16 %v86
    %v138 = vunpack.c.l.b16 %v87
    %v139 = vunpack.c.h.b16 %v87
    %v140 = vunpack.c.l.b16 %v88
    %v141 = vunpack.c.h.b16 %v88
    %v142 = vunpack.c.l.b16 %v89
    %v143 = vunpack.c.h.b16 %v89
    %v144 = vunpack.c.l.b16 %v90
    %v145 = vunpack.c.h.b16 %v90
    %v146 = vunpack.c.l.b16 %v91
    %v147 = vunpack.c.h.b16 %v91
    %v148 = vunpack.c.l.b16 %v92
    %v149 = vunpack.c.h.b16 %v92
    %v150 = vunpack.c.l.b16 %v93
    %v151 = vunpack.c.h.b16 %v93
    %v152 = vunpack.c.l.b16 %v94
    %v153 = vunpack.c.h.b16 %v94
    %v154 = vunpack.c.l.b16 %v95
    %v155 = vunpack.c.h.b16 %v95
    %v156 = vpack.c.b16 %v126, %v124
    %v157 = vpack.c.b16 %v127, %v125
    %v158 = vpack.c.b16 %v130, %v128
    %v159 = vpack.c.b16 %v131, %v129
    %v160 = vpack.c.b16 %v134, %v132
    %v161 = vpack.c.b16 %v135, %v133
    %v162 = vpack.c.b16 %v138, %v136
    %v163 = vpack.c.b16 %v139, %v137
    %v164 = vpack.c.b16 %v142, %v140
    %v165 = vpack.c.b16 %v143, %v141
    %v166 = vpack.c.b16 %v146, %v144
    %v167 = vpack.c.b16 %v147, %v145
    %v168 = vpack.c.b16 %v150, %v148
    %v169 = vpack.c.b16 %v151, %v149
    %v170 = vpack.c.b16 %v154, %v152
    %v171 = vpack.c.b16 %v155, %v153
    %188 = vmatprep.subr.bf16.mxu0 %v171
    %189 = vmatpush1.bf16.msra.mxu0 %v170
    %190 = vmatprep.subr.bf16.mxu0 %v169
    %191 = vmatpush1.bf16.msra.mxu0 %v168
    %192 = vmatprep.subr.bf16.mxu0 %v167
    %193 = vmatpush1.bf16.msra.mxu0 %v166
    %194 = vmatprep.subr.bf16.mxu0 %v165
    %195 = vmatpush1.bf16.msra.mxu0 %v164
    %196 = vmatprep.subr.bf16.mxu0 %v163
    %197 = vmatpush1.bf16.msra.mxu0 %v162
    %198 = vmatprep.subr.bf16.mxu0 %v161
    %199 = vmatpush1.bf16.msra.mxu0 %v160
    %200 = vmatprep.subr.bf16.mxu0 %v159
    %201 = vmatpush1.bf16.msra.mxu0 %v158
    %202 = vmatprep.subr.bf16.mxu0 %v157
    %203 = vmatpush1.bf16.msra.mxu0 %v156
    %204 = vmatprep.subr.bf16.mxu0 0
    %205 = vmatpush2.bf16.msra.mxu0 0
    %206 = vmatprep.subr.bf16.mxu0 0
    %207 = vmatpush2.bf16.msra.mxu0 0
    %208 = vmatprep.subr.bf16.mxu0 0
    %209 = vmatpush2.bf16.msra.mxu0 0
    %210 = vmatprep.subr.bf16.mxu0 0
    %211 = vmatpush2.bf16.msra.mxu0 0
    %212 = vmatprep.subr.bf16.mxu0 0
    %213 = vmatpush2.bf16.msra.mxu0 0
    %214 = vmatprep.subr.bf16.mxu0 0
    %215 = vmatpush2.bf16.msra.mxu0 0
    %216 = vmatprep.subr.bf16.mxu0 0
    %217 = vmatpush2.bf16.msra.mxu0 0
    %218 = vmatprep.subr.bf16.mxu0 0
    %219 = vmatpush2.bf16.msra.mxu0 0
    %220 = vmatprep.mubr.bf16.mxu0 0
    %221 = vmatmul.mubr.bf16.gmra.mxu0 %v79
    %v222 = vpop.f32.mrf.mxu0
    %v223 = vadd.f32 %v101, %v222
    %v224 = vpop.f32.mrf.mxu0
    %v225 = vadd.f32 %v105, %v224
    %v226 = vpop.f32.mrf.mxu0
    %v227 = vpop.f32.mrf.mxu0
    %228 = vdwg.mxu0
    %v229 = vmax.f32 %v223, 0.0
    %v230 = vmax.f32 %v225, 0.0
    %v231 = vpack.c.bf16 %v229, %v229
    %v232 = vpack.c.bf16 %v230, %v230
    %v233 = vld [vmem:[#allocation7] sm:$0xff]
    %v234 = vld [vmem:[#allocation7 + $0x8] sm:$0xff]
    %v235 = vld [vmem:[#allocation7 + $0x10] sm:$0xff]
    %v236 = vld [vmem:[#allocation7 + $0x18] sm:$0xff]
    %v237 = vld [vmem:[#allocation7 + $0x20] sm:$0xff]
    %v238 = vld [vmem:[#allocation7 + $0x28] sm:$0xff]
    %v239 = vld [vmem:[#allocation7 + $0x30] sm:$0xff]
    %v240 = vld [vmem:[#allocation7 + $0x38] sm:$0xff]
    %v241 = vld [vmem:[#allocation7 + $0x40] sm:$0xff]
    %v242 = vld [vmem:[#allocation7 + $0x48] sm:$0xff]
    %v243 = vld [vmem:[#allocation7 + $0x50] sm:$0xff]
    %v244 = vld [vmem:[#allocation7 + $0x58] sm:$0xff]
    %v245 = vld [vmem:[#allocation7 + $0x60] sm:$0xff]
    %v246 = vld [vmem:[#allocation7 + $0x68] sm:$0xff]
    %v247 = vld [vmem:[#allocation7 + $0x70] sm:$0xff]
    %v248 = vld [vmem:[#allocation7 + $0x78] sm:$0xff]
    %v249 = vld [vmem:[#allocation7 + $0x80] sm:$0xff]
    %v250 = vld [vmem:[#allocation7 + $0x88] sm:$0xff]
    %v251 = vld [vmem:[#allocation7 + $0x90] sm:$0xff]
    %v252 = vld [vmem:[#allocation7 + $0x98] sm:$0xff]
    %v253 = vld [vmem:[#allocation7 + $0xa0] sm:$0xff]
    %v254 = vld [vmem:[#allocation7 + $0xa8] sm:$0xff]
    %v255 = vld [vmem:[#allocation7 + $0xb0] sm:$0xff]
    %v256 = vld [vmem:[#allocation7 + $0xb8] sm:$0xff]
    %v257 = vld [vmem:[#allocation7 + $0xc0] sm:$0xff]
    %v258 = vld [vmem:[#allocation7 + $0xc8] sm:$0xff]
    %v259 = vld [vmem:[#allocation7 + $0xd0] sm:$0xff]
    %v260 = vld [vmem:[#allocation7 + $0xd8] sm:$0xff]
    %v261 = vld [vmem:[#allocation7 + $0xe0] sm:$0xff]
    %v262 = vld [vmem:[#allocation7 + $0xe8] sm:$0xff]
    %v263 = vld [vmem:[#allocation7 + $0xf0] sm:$0xff]
    %v264 = vld [vmem:[#allocation7 + $0xf8] sm:$0xff]
    %v265 = vld [vmem:[%s4] sm:$0x3]
    %v267 = vlaneseq
    %v268 = vshrl.u32 %v267, 7
    %v269 = vsub.s32 0, %v268
    %v270 = vrot.slane %v265, %v269
    %v271 = vlaneseq
    %v272 = vshrl.u32 %v271, 7
    %v273 = vsub.s32 1, %v272
    %v274 = vrot.slane %v265, %v273
    %v309 = vunpack.c.l.b16 %v233
    %v310 = vunpack.c.h.b16 %v233
    %v311 = vunpack.c.l.b16 %v234
    %v312 = vunpack.c.h.b16 %v234
    %v313 = vunpack.c.l.b16 %v235
    %v314 = vunpack.c.h.b16 %v235
    %v315 = vunpack.c.l.b16 %v236
    %v316 = vunpack.c.h.b16 %v236
    %v317 = vunpack.c.l.b16 %v237
    %v318 = vunpack.c.h.b16 %v237
    %v319 = vunpack.c.l.b16 %v238
    %v320 = vunpack.c.h.b16 %v238
    %v321 = vunpack.c.l.b16 %v239
    %v322 = vunpack.c.h.b16 %v239
    %v323 = vunpack.c.l.b16 %v240
    %v324 = vunpack.c.h.b16 %v240
    %v325 = vunpack.c.l.b16 %v241
    %v326 = vunpack.c.h.b16 %v241
    %v327 = vunpack.c.l.b16 %v242
    %v328 = vunpack.c.h.b16 %v242
    %v329 = vunpack.c.l.b16 %v243
    %v330 = vunpack.c.h.b16 %v243
    %v331 = vunpack.c.l.b16 %v244
    %v332 = vunpack.c.h.b16 %v244
    %v333 = vunpack.c.l.b16 %v245
    %v334 = vunpack.c.h.b16 %v245
    %v335 = vunpack.c.l.b16 %v246
    %v336 = vunpack.c.h.b16 %v246
    %v337 = vunpack.c.l.b16 %v247
    %v338 = vunpack.c.h.b16 %v247
    %v339 = vunpack.c.l.b16 %v248
    %v340 = vunpack.c.h.b16 %v248
    %v341 = vunpack.c.l.b16 %v249
    %v342 = vunpack.c.h.b16 %v249
    %v343 = vunpack.c.l.b16 %v250
    %v344 = vunpack.c.h.b16 %v250
    %v345 = vunpack.c.l.b16 %v251
    %v346 = vunpack.c.h.b16 %v251
    %v347 = vunpack.c.l.b16 %v252
    %v348 = vunpack.c.h.b16 %v252
    %v349 = vunpack.c.l.b16 %v253
    %v350 = vunpack.c.h.b16 %v253
    %v351 = vunpack.c.l.b16 %v254
    %v352 = vunpack.c.h.b16 %v254
    %v353 = vunpack.c.l.b16 %v255
    %v354 = vunpack.c.h.b16 %v255
    %v355 = vunpack.c.l.b16 %v256
    %v356 = vunpack.c.h.b16 %v256
    %v357 = vunpack.c.l.b16 %v257
    %v358 = vunpack.c.h.b16 %v257
    %v359 = vunpack.c.l.b16 %v258
    %v360 = vunpack.c.h.b16 %v258
    %v361 = vunpack.c.l.b16 %v259
    %v362 = vunpack.c.h.b16 %v259
    %v363 = vunpack.c.l.b16 %v260
    %v364 = vunpack.c.h.b16 %v260
    %v365 = vunpack.c.l.b16 %v261
    %v366 = vunpack.c.h.b16 %v261
    %v367 = vunpack.c.l.b16 %v262
    %v368 = vunpack.c.h.b16 %v262
    %v369 = vunpack.c.l.b16 %v263
    %v370 = vunpack.c.h.b16 %v263
    %v371 = vunpack.c.l.b16 %v264
    %v372 = vunpack.c.h.b16 %v264
    %v373 = vpack.c.b16 %v311, %v309
    %v374 = vpack.c.b16 %v312, %v310
    %v375 = vpack.c.b16 %v315, %v313
    %v376 = vpack.c.b16 %v316, %v314
    %v377 = vpack.c.b16 %v319, %v317
    %v378 = vpack.c.b16 %v320, %v318
    %v379 = vpack.c.b16 %v323, %v321
    %v380 = vpack.c.b16 %v324, %v322
    %v381 = vpack.c.b16 %v327, %v325
    %v382 = vpack.c.b16 %v328, %v326
    %v383 = vpack.c.b16 %v331, %v329
    %v384 = vpack.c.b16 %v332, %v330
    %v385 = vpack.c.b16 %v335, %v333
    %v386 = vpack.c.b16 %v336, %v334
    %v387 = vpack.c.b16 %v339, %v337
    %v388 = vpack.c.b16 %v340, %v338
    %v389 = vpack.c.b16 %v343, %v341
    %v390 = vpack.c.b16 %v344, %v342
    %v391 = vpack.c.b16 %v347, %v345
    %v392 = vpack.c.b16 %v348, %v346
    %v393 = vpack.c.b16 %v351, %v349
    %v394 = vpack.c.b16 %v352, %v350
    %v395 = vpack.c.b16 %v355, %v353
    %v396 = vpack.c.b16 %v356, %v354
    %v397 = vpack.c.b16 %v359, %v357
    %v398 = vpack.c.b16 %v360, %v358
    %v399 = vpack.c.b16 %v363, %v361
    %v400 = vpack.c.b16 %v364, %v362
    %v401 = vpack.c.b16 %v367, %v365
    %v402 = vpack.c.b16 %v368, %v366
    %v403 = vpack.c.b16 %v371, %v369
    %v404 = vpack.c.b16 %v372, %v370
    %437 = vmatprep.subr.bf16.mxu0 %v388
    %438 = vmatpush1.bf16.msra.mxu0 %v387
    %439 = vmatprep.subr.bf16.mxu0 %v386
    %440 = vmatpush1.bf16.msra.mxu0 %v385
    %441 = vmatprep.subr.bf16.mxu0 %v384
    %442 = vmatpush1.bf16.msra.mxu0 %v383
    %443 = vmatprep.subr.bf16.mxu0 %v382
    %444 = vmatpush1.bf16.msra.mxu0 %v381
    %445 = vmatprep.subr.bf16.mxu0 %v380
    %446 = vmatpush1.bf16.msra.mxu0 %v379
    %447 = vmatprep.subr.bf16.mxu0 %v378
    %448 = vmatpush1.bf16.msra.mxu0 %v377
    %449 = vmatprep.subr.bf16.mxu0 %v376
    %450 = vmatpush1.bf16.msra.mxu0 %v375
    %451 = vmatprep.subr.bf16.mxu0 %v374
    %452 = vmatpush1.bf16.msra.mxu0 %v373
    %453 = vmatprep.subr.bf16.mxu0 %v404
    %454 = vmatpush2.bf16.msra.mxu0 %v403
    %455 = vmatprep.subr.bf16.mxu0 %v402
    %456 = vmatpush2.bf16.msra.mxu0 %v401
    %457 = vmatprep.subr.bf16.mxu0 %v400
    %458 = vmatpush2.bf16.msra.mxu0 %v399
    %459 = vmatprep.subr.bf16.mxu0 %v398
    %460 = vmatpush2.bf16.msra.mxu0 %v397
    %461 = vmatprep.subr.bf16.mxu0 %v396
    %462 = vmatpush2.bf16.msra.mxu0 %v395
    %463 = vmatprep.subr.bf16.mxu0 %v394
    %464 = vmatpush2.bf16.msra.mxu0 %v393
    %465 = vmatprep.subr.bf16.mxu0 %v392
    %466 = vmatpush2.bf16.msra.mxu0 %v391
    %467 = vmatprep.subr.bf16.mxu0 %v390
    %468 = vmatpush2.bf16.msra.mxu0 %v389
    %469 = vmatprep.mubr.bf16.mxu0 %v232
    %470 = vmatmul.mubr.bf16.gmra.mxu0 %v231
    %v471 = vpop.f32.mrf.mxu0
    %v472 = vadd.f32 %v270, %v471
    %v473 = vpop.f32.mrf.mxu0
    %v474 = vadd.f32 %v274, %v473
    %v475 = vpop.f32.mrf.mxu0
    %v476 = vpop.f32.mrf.mxu0
    %477 = vdwg.mxu0
    %v478 = vmax.f32 %v472, 0.0
    %v479 = vmax.f32 %v474, 0.0
    %v480 = vld [vmem:[%s5] sm:$0x3]
    %v482 = vlaneseq
    %v483 = vshrl.u32 %v482, 7
    %v484 = vsub.s32 0, %v483
    %v485 = vrot.slane %v480, %v484
    %v486 = vlaneseq
    %v487 = vshrl.u32 %v486, 7
    %v488 = vsub.s32 1, %v487
    %v489 = vrot.slane %v480, %v488
    %v492 = vmul.f32 %v478, %v485
    %v493 = vmul.f32 %v479, %v489
    %494 = vadd.xlane.f32.xlu0 %v492
    %v495 = vpop.xlane.xlu0 %494
    %s496 = sld [smem:[#allocation8]]
    %v497 = vstv %s496
    %v498 = vadd.f32 %v495, %v497
    %499 = vadd.xlane.f32.xlu0 %v493
    %v500 = vpop.xlane.xlu0 %499
    %s501 = sld [smem:[#allocation8 + $0x1]]
    %v502 = vstv %s501
    %v503 = vadd.f32 %v500, %v502
    %vm504 = vcmask 7168
    %505 = vst.msk [vmem:[%s7] sm:$0xff] %vm504, %v498
    %vm506 = vcmask 15368
    %507 = vst.msk [vmem:[%s7] sm:$0xff] %vm506, %v503
    // Predicated region
    $region46: #{tpu_custom_call.1} parent=1 // pred_check
      _
    $region47: #{tpu_custom_call.1} parent=1 // pred_check_branch
      %509 = sbr.rel (0) target = $region49
    $region48: #{tpu_custom_call.1} parent=1 // pred_region
      _
    $region49: #{tpu_custom_call.1} parent=1 // pred_fallthru
      _
    // Predicated region
    $region50: #{tpu_custom_call.1} parent=1 // pred_check
      _
    $region51: #{tpu_custom_call.1} parent=1 // pred_check_branch
      %511 = sbr.rel (0) target = $region53
    $region52: #{tpu_custom_call.1} parent=1 // pred_region
      _
    $region53: #{tpu_custom_call.1} parent=1 // pred_fallthru
      _
    %512 = vsyncpa [#allocation3], 1
    %513 = vsyncpa [#allocation6], 1
    %514 = vsyncpa [#allocation4], 1

</llo_original>
